<compile_context>
chip_gen: v6e
topology: v6e:2x2x1
jax: 0.10.0
libtpu: 0.0.40
codegen_flags: <defaults>
</compile_context>

<pallas_src>
import jax
import jax.numpy as jnp
from jax.experimental import pallas as pl
from jax.experimental.pallas import tpu as pltpu

# CartPole-v0 dims implied by the module.
STATE_DIM = 4
HIDDEN_DIM = 128
ACTION_DIM = 2
BATCH = 256          # "rollout-sized" batch; grid amortizes per-step overhead
BLOCK_B = 128        # lanes per grid step


def _policy_kernel(x_ref, w1_ref, b1_ref, w2_ref, b2_ref, out_ref):
    # fc1 + ReLU:  (H, S) @ (S, TM) -> (H, TM), f32 accumulate on the MXU.
    h = jnp.dot(w1_ref[...], x_ref[...], preferred_element_type=jnp.float32)
    h = jnp.maximum(h + b1_ref[...], 0.0)          # b1 is (H, 1) -> broadcast over lanes

    # fc2:  (A, H) @ (H, TM) -> (A, TM)  (lane-dense logits, batch on lanes).
    z = jnp.dot(w2_ref[...], h, preferred_element_type=jnp.float32)
    z = z + b2_ref[...]                            # b2 is (A, 1)

    # softmax over the action axis (sublane axis, size A=2).
    m = jnp.max(z, axis=0, keepdims=True)
    e = jnp.exp(z - m)                             # exp -> EUP
    out_ref[...] = e / jnp.sum(e, axis=0, keepdims=True)


def policy_forward(x, w1, b1, w2, b2, *, block_b=BLOCK_B):
    """x: (B, state_dim) f32.  Weights in torch layout: w1 (H,S), b1 (H,1), w2 (A,H), b2 (A,1)."""
    B, S = x.shape
    H = w1.shape[0]
    A = w2.shape[0]

    n_blocks = pl.cdiv(B, block_b)
    Bp = n_blocks * block_b

    # Batch on the lane axis; zero-pad ragged tail (sliced off below).
    xt = jnp.transpose(x).astype(jnp.float32)      # (S, B)
    if Bp != B:
        xt = jnp.pad(xt, ((0, 0), (0, Bp - B)))

    probs_t = pl.pallas_call(
        _policy_kernel,
        out_shape=jax.ShapeDtypeStruct((A, Bp), jnp.float32),
        grid=(n_blocks,),
        in_specs=[
            pl.BlockSpec((S, block_b), lambda i: (0, i)),   # x^T batch tile
            pl.BlockSpec((H, S), lambda i: (0, 0)),         # w1: VMEM-resident
            pl.BlockSpec((H, 1), lambda i: (0, 0)),         # b1
            pl.BlockSpec((A, H), lambda i: (0, 0)),         # w2
            pl.BlockSpec((A, 1), lambda i: (0, 0)),         # b2
        ],
        out_specs=pl.BlockSpec((A, block_b), lambda i: (0, i)),   # lane-dense output
        compiler_params=pltpu.CompilerParams(
            dimension_semantics=("parallel",),
        ),
    )(xt, w1, b1, w2, b2)

    return jnp.transpose(probs_t[:, :B])           # (B, A)


def init_params(key):
    """torch.nn.Linear default init: U[-1/sqrt(fan_in), 1/sqrt(fan_in)], torch weight layout."""
    k1, k2, k3, k4 = jax.random.split(key, 4)
    lim1 = 1.0 / jnp.sqrt(jnp.float32(STATE_DIM))
    lim2 = 1.0 / jnp.sqrt(jnp.float32(HIDDEN_DIM))
    w1 = jax.random.uniform(k1, (HIDDEN_DIM, STATE_DIM), jnp.float32, -lim1, lim1)
    b1 = jax.random.uniform(k2, (HIDDEN_DIM, 1), jnp.float32, -lim1, lim1)
    w2 = jax.random.uniform(k3, (ACTION_DIM, HIDDEN_DIM), jnp.float32, -lim2, lim2)
    b2 = jax.random.uniform(k4, (ACTION_DIM, 1), jnp.float32, -lim2, lim2)
    return w1, b1, w2, b2


def _reference(x, w1, b1, w2, b2):
    h = jnp.maximum(x @ w1.T + b1.reshape(1, -1), 0.0)
    logits = h @ w2.T + b2.reshape(1, -1)
    return jax.nn.softmax(logits, axis=1)


if __name__ == "__main__":
    key = jax.random.PRNGKey(0)
    kx, kp = jax.random.split(key, 2)

    x = jax.random.normal(kx, (BATCH, STATE_DIM), jnp.float32)
    w1, b1, w2, b2 = init_params(kp)

    out = policy_forward(x, w1, b1, w2, b2)
    out = jax.block_until_ready(out)

    ref = _reference(x, w1, b1, w2, b2)
    assert out.shape == (BATCH, ACTION_DIM), out.shape
    assert jnp.allclose(jnp.sum(out, axis=1), 1.0, atol=1e-5)
    assert jnp.allclose(out, ref, atol=1e-5, rtol=1e-5)

    print("KERNEL_OK")
</pallas_src>

<mosaic_0001>
module attributes {stable_mosaic.version = 11 : i64} {
  func.func @_policy_kernel(%arg0: i32, %arg1: memref<4x128xf32, #tpu.memory_space<vmem>>, %arg2: memref<128x4xf32, #tpu.memory_space<vmem>>, %arg3: memref<128x1xf32, #tpu.memory_space<vmem>>, %arg4: memref<2x128xf32, #tpu.memory_space<vmem>>, %arg5: memref<2x1xf32, #tpu.memory_space<vmem>>, %arg6: memref<2x128xf32, #tpu.memory_space<vmem>>) attributes {dimension_semantics = [#tpu.dimension_semantics<parallel>], iteration_bounds = array<i64: 2>, scalar_prefetch = 0 : i64, scratch_operands = 0 : i64, tpu.core_type = #tpu.core_type<tc>, window_params = [{transform_indices = @transform_0, window_bounds = array<i64: 4, 128>}, {pipeline_mode = #tpu.pipeline_mode<synchronous>, transform_indices = @transform_1, window_bounds = array<i64: 128, 4>}, {pipeline_mode = #tpu.pipeline_mode<synchronous>, transform_indices = @transform_2, window_bounds = array<i64: 128, 1>}, {pipeline_mode = #tpu.pipeline_mode<synchronous>, transform_indices = @transform_3, window_bounds = array<i64: 2, 128>}, {pipeline_mode = #tpu.pipeline_mode<synchronous>, transform_indices = @transform_4, window_bounds = array<i64: 2, 1>}, {transform_indices = @transform_5, window_bounds = array<i64: 2, 128>}]} {
    %c0 = arith.constant 0 : index
    %c0_0 = arith.constant 0 : index
    %0 = vector.load %arg2[%c0, %c0_0] : memref<128x4xf32, #tpu.memory_space<vmem>>, vector<128x4xf32>
    %c0_1 = arith.constant 0 : index
    %c0_2 = arith.constant 0 : index
    %1 = vector.load %arg1[%c0_1, %c0_2] : memref<4x128xf32, #tpu.memory_space<vmem>>, vector<4x128xf32>
    %cst = arith.constant dense<0.000000e+00> : vector<128x128xf32>
    %2 = tpu.matmul %0, %1, %cst {dimension_numbers = #tpu.dot_dimension_numbers<[1], [0], [0], [1], [0, 0, 1, 1], [], []>} : vector<128x4xf32>, vector<4x128xf32>, vector<128x128xf32> -> vector<128x128xf32>
    %c0_3 = arith.constant 0 : index
    %c0_4 = arith.constant 0 : index
    %3 = vector.load %arg3[%c0_3, %c0_4] : memref<128x1xf32, #tpu.memory_space<vmem>>, vector<128x1xf32>
    %4 = vector.broadcast %3 : vector<128x1xf32> to vector<128x128xf32>
    %5 = arith.addf %2, %4 : vector<128x128xf32>
    %cst_5 = arith.constant 0.000000e+00 : f32
    %6 = vector.broadcast %cst_5 : f32 to vector<128x128xf32>
    %7 = arith.maximumf %5, %6 : vector<128x128xf32>
    %c0_6 = arith.constant 0 : index
    %c0_7 = arith.constant 0 : index
    %8 = vector.load %arg4[%c0_6, %c0_7] : memref<2x128xf32, #tpu.memory_space<vmem>>, vector<2x128xf32>
    %cst_8 = arith.constant dense<0.000000e+00> : vector<2x128xf32>
    %9 = tpu.matmul %8, %7, %cst_8 {dimension_numbers = #tpu.dot_dimension_numbers<[1], [0], [0], [1], [0, 0, 1, 1], [], []>} : vector<2x128xf32>, vector<128x128xf32>, vector<2x128xf32> -> vector<2x128xf32>
    %c0_9 = arith.constant 0 : index
    %c0_10 = arith.constant 0 : index
    %10 = vector.load %arg5[%c0_9, %c0_10] : memref<2x1xf32, #tpu.memory_space<vmem>>, vector<2x1xf32>
    %11 = vector.broadcast %10 : vector<2x1xf32> to vector<2x128xf32>
    %12 = arith.addf %9, %11 : vector<2x128xf32>
    %cst_11 = arith.constant dense<0xFF800000> : vector<128xf32>
    %13 = vector.multi_reduction <maximumf>, %12, %cst_11 [0] : vector<2x128xf32> to vector<128xf32>
    %14 = vector.shape_cast %13 : vector<128xf32> to vector<1x128xf32>
    %15 = vector.broadcast %14 : vector<1x128xf32> to vector<2x128xf32>
    %16 = arith.subf %12, %15 : vector<2x128xf32>
    %17 = math.exp %16 : vector<2x128xf32>
    %cst_12 = arith.constant dense<0.000000e+00> : vector<128xf32>
    %18 = vector.multi_reduction <add>, %17, %cst_12 [0] : vector<2x128xf32> to vector<128xf32>
    %19 = vector.shape_cast %18 : vector<128xf32> to vector<1x128xf32>
    %20 = vector.broadcast %19 : vector<1x128xf32> to vector<2x128xf32>
    %21 = arith.divf %17, %20 : vector<2x128xf32>
    %c0_13 = arith.constant 0 : index
    %c0_14 = arith.constant 0 : index
    %22 = vector.load %arg6[%c0_13, %c0_14] : memref<2x128xf32, #tpu.memory_space<vmem>>, vector<2x128xf32>
    tpu.vector_store %arg6[%c0_13, %c0_14], %21 {strides = array<i32>} : memref<2x128xf32, #tpu.memory_space<vmem>>, vector<2x128xf32>,
    return
  }
  func.func @transform_0(%arg0: i32) -> (i32, i32) {
    %c0_i32 = arith.constant 0 : i32
    %c0_i32_0 = arith.constant 0 : i32
    return %c0_i32, %arg0 : i32, i32
  }
  func.func @transform_1(%arg0: i32) -> (i32, i32) {
    %c0_i32 = arith.constant 0 : i32
    %c0_i32_0 = arith.constant 0 : i32
    %c0_i32_1 = arith.constant 0 : i32
    return %c0_i32, %c0_i32_0 : i32, i32
  }
  func.func @transform_2(%arg0: i32) -> (i32, i32) {
    %c0_i32 = arith.constant 0 : i32
    %c0_i32_0 = arith.constant 0 : i32
    %c0_i32_1 = arith.constant 0 : i32
    return %c0_i32, %c0_i32_0 : i32, i32
  }
  func.func @transform_3(%arg0: i32) -> (i32, i32) {
    %c0_i32 = arith.constant 0 : i32
    %c0_i32_0 = arith.constant 0 : i32
    %c0_i32_1 = arith.constant 0 : i32
    return %c0_i32, %c0_i32_0 : i32, i32
  }
  func.func @transform_4(%arg0: i32) -> (i32, i32) {
    %c0_i32 = arith.constant 0 : i32
    %c0_i32_0 = arith.constant 0 : i32
    %c0_i32_1 = arith.constant 0 : i32
    return %c0_i32, %c0_i32_0 : i32, i32
  }
  func.func @transform_5(%arg0: i32) -> (i32, i32) {
    %c0_i32 = arith.constant 0 : i32
    %c0_i32_0 = arith.constant 0 : i32
    return %c0_i32, %arg0 : i32, i32
  }
}

</mosaic_0001>

<llo_original>
// kernel: tpu_custom_call.1
$region0: #{tpu_custom_call.1}
  #allocation0 [shape = 'u32[]', space=smem, size = 0x4, offset = 0x4, fixed_abs, tag = 'smem constant byte address 0x4 - core index']
  #allocation1 [shape = 'u32[144,128]{1,0:T(1,128)}', space=vmem, size = 0x12000, scoped, tag = 'internal scratch']
  %s0 = inlined_call_operand.vmem [shape: f32[4,256], index: 0, kind: input, shape index: {}]
  %s1 = inlined_call_operand.vmem [shape: f32[128,4], index: 1, kind: input, shape index: {}]
  %s2 = inlined_call_operand.vmem [shape: f32[128,1], index: 2, kind: input, shape index: {}]
  %s3 = inlined_call_operand.vmem [shape: f32[2,128], index: 3, kind: input, shape index: {}]
  %s4 = inlined_call_operand.vmem [shape: f32[2,1], index: 4, kind: input, shape index: {}]
  %s5 = inlined_call_operand.hbm [shape: f32[2,256], index: 5, kind: output, shape index: {}]
  %s6 = sld [smem:[#allocation0]]
  $region53: #{tpu_custom_call.1} parent=0
    _
  %s8 = ssub.s32 1, %s6
  %s9 = scalar_select 0, %s8, %s6
  $region1: #{tpu_custom_call.1} parent=0
    #allocation2 [shape = 'u8[2048]{0}', space=vmem, size = 0x800, scoped, tag = 'output window, operand 0']
    #allocation3 [shape = 's32[2]{0}', space=sflag, size = 0x8, scoped, tag = 'scoped memory for tpu_custom_call.1']
    %10 = vsyncpa [#allocation3], 0
    %s11 = scalar_lea.sflag [#allocation3], 1
    %12 = vsyncpa %s11, 0
    loop: start=0, step=1, limit=4
    $region2: #{tpu_custom_call.1} parent=1 // loop_pre_header
      _
    $region3: #{tpu_custom_call.1} parent=1 // loop_header
      %s14 = sphi 0, %s18
      %p15 = scmp.ge.s32.totalorder %s14, 4
      %s24 = sphi 0, %s26
      %s27 = sphi 0, %s24
      %s28 = sphi 0, %s27
      %s44 = sphi 0, %s28
      %s48 = sphi 0, %s48
      %s50 = sphi 0, %s48
      %s51 = sphi 0, %s50
      %s65 = sphi 0, %s51
      %s69 = sphi 0, %s69
      %s71 = sphi 0, %s69
      %s72 = sphi 0, %s71
      %s86 = sphi 0, %s72
      %s90 = sphi 0, %s90
      %s92 = sphi 0, %s90
      %s93 = sphi 0, %s92
      %s107 = sphi 0, %s93
      %s111 = sphi 0, %s111
      %s113 = sphi 0, %s111
      %s114 = sphi 0, %s113
      %s128 = sphi 0, %s114
      %s134 = sphi 0, %s136
      %s137 = sphi 0, %s134
      %s138 = sphi 0, %s137
      %s154 = sphi 0, %s138
    $region4: #{tpu_custom_call.1} parent=1 // loop_header_branch
      %17 = sbr.rel (%p15) target = $region8
    $region5: #{tpu_custom_call.1} parent=1 // loop_body
      %s19 = ssub.s32 %s14, 1
      %s20 = ssub.s32 %s14, 2
      %s21 = sadd.s32 %s14, 1
      %s22 = ssub.s32 %s14, %s21
      %p23 = scmp.eq.s32.totalorder %s22, 0
      %s25 = sadd.s32 %s24, 1
      %s26 = scalar_select %p23, %s24, %s25
      %p29 = pneg %p23
      %p30 = scmp.eq.s32.totalorder %s14, 1
      %p31 = por %p29, %p30
      %p32 = scmp.ne.s32.totalorder %s24, %s27
      %p33 = scmp.eq.s32.totalorder %s14, 0
      %p34 = por %p32, %p33
      %p35 = scmp.ne.s32.totalorder %s24, %s27
      %p36 = scmp.eq.s32.totalorder %s19, 1
      %p37 = por %p35, %p36
      %p38 = scmp.ne.s32.totalorder %s27, %s28
      %p39 = scmp.eq.s32.totalorder %s19, 0
      %p40 = por %p38, %p39
      %p41 = scmp.ne.s32.totalorder %s27, %s28
      %p42 = scmp.eq.s32.totalorder %s20, 1
      %p43 = por %p41, %p42
      %p45 = scmp.ne.s32.totalorder %s28, %s44
      %p46 = scmp.eq.s32.totalorder %s20, 0
      %p47 = por %p45, %p46
      %s49 = sadd.s32 %s48, 1
      %p52 = scmp.eq.s32.totalorder %s14, 1
      %p53 = scmp.ne.s32.totalorder %s48, %s50
      %p54 = scmp.eq.s32.totalorder %s14, 0
      %p55 = por %p53, %p54
      %p56 = scmp.ne.s32.totalorder %s48, %s50
      %p57 = scmp.eq.s32.totalorder %s19, 1
      %p58 = por %p56, %p57
      %p59 = scmp.ne.s32.totalorder %s50, %s51
      %p60 = scmp.eq.s32.totalorder %s19, 0
      %p61 = por %p59, %p60
      %p62 = scmp.ne.s32.totalorder %s50, %s51
      %p63 = scmp.eq.s32.totalorder %s20, 1
      %p64 = por %p62, %p63
      %p66 = scmp.ne.s32.totalorder %s51, %s65
      %p67 = scmp.eq.s32.totalorder %s20, 0
      %p68 = por %p66, %p67
      %s70 = sadd.s32 %s69, 1
      %p73 = scmp.eq.s32.totalorder %s14, 1
      %p74 = scmp.ne.s32.totalorder %s69, %s71
      %p75 = scmp.eq.s32.totalorder %s14, 0
      %p76 = por %p74, %p75
      %p77 = scmp.ne.s32.totalorder %s69, %s71
      %p78 = scmp.eq.s32.totalorder %s19, 1
      %p79 = por %p77, %p78
      %p80 = scmp.ne.s32.totalorder %s71, %s72
      %p81 = scmp.eq.s32.totalorder %s19, 0
      %p82 = por %p80, %p81
      %p83 = scmp.ne.s32.totalorder %s71, %s72
      %p84 = scmp.eq.s32.totalorder %s20, 1
      %p85 = por %p83, %p84
      %p87 = scmp.ne.s32.totalorder %s72, %s86
      %p88 = scmp.eq.s32.totalorder %s20, 0
      %p89 = por %p87, %p88
      %s91 = sadd.s32 %s90, 1
      %p94 = scmp.eq.s32.totalorder %s14, 1
      %p95 = scmp.ne.s32.totalorder %s90, %s92
      %p96 = scmp.eq.s32.totalorder %s14, 0
      %p97 = por %p95, %p96
      %p98 = scmp.ne.s32.totalorder %s90, %s92
      %p99 = scmp.eq.s32.totalorder %s19, 1
      %p100 = por %p98, %p99
      %p101 = scmp.ne.s32.totalorder %s92, %s93
      %p102 = scmp.eq.s32.totalorder %s19, 0
      %p103 = por %p101, %p102
      %p104 = scmp.ne.s32.totalorder %s92, %s93
      %p105 = scmp.eq.s32.totalorder %s20, 1
      %p106 = por %p104, %p105
      %p108 = scmp.ne.s32.totalorder %s93, %s107
      %p109 = scmp.eq.s32.totalorder %s20, 0
      %p110 = por %p108, %p109
      %s112 = sadd.s32 %s111, 1
      %p115 = scmp.eq.s32.totalorder %s14, 1
      %p116 = scmp.ne.s32.totalorder %s111, %s113
      %p117 = scmp.eq.s32.totalorder %s14, 0
      %p118 = por %p116, %p117
      %p119 = scmp.ne.s32.totalorder %s111, %s113
      %p120 = scmp.eq.s32.totalorder %s19, 1
      %p121 = por %p119, %p120
      %p122 = scmp.ne.s32.totalorder %s113, %s114
      %p123 = scmp.eq.s32.totalorder %s19, 0
      %p124 = por %p122, %p123
      %p125 = scmp.ne.s32.totalorder %s113, %s114
      %p126 = scmp.eq.s32.totalorder %s20, 1
      %p127 = por %p125, %p126
      %p129 = scmp.ne.s32.totalorder %s114, %s128
      %p130 = scmp.eq.s32.totalorder %s20, 0
      %p131 = por %p129, %p130
      %s132 = ssub.s32 %s14, %s21
      %p133 = scmp.eq.s32.totalorder %s132, 0
      %s135 = sadd.s32 %s134, 1
      %s136 = scalar_select %p133, %s134, %s135
      %p139 = pneg %p133
      %p140 = scmp.eq.s32.totalorder %s14, 1
      %p141 = por %p139, %p140
      %p142 = scmp.ne.s32.totalorder %s134, %s137
      %p143 = scmp.eq.s32.totalorder %s14, 0
      %p144 = por %p142, %p143
      %p145 = scmp.ne.s32.totalorder %s134, %s137
      %p146 = scmp.eq.s32.totalorder %s19, 1
      %p147 = por %p145, %p146
      %p148 = scmp.ne.s32.totalorder %s137, %s138
      %p149 = scmp.eq.s32.totalorder %s19, 0
      %p150 = por %p148, %p149
      %p151 = scmp.ne.s32.totalorder %s137, %s138
      %p152 = scmp.eq.s32.totalorder %s20, 1
      %p153 = por %p151, %p152
      %p155 = scmp.ne.s32.totalorder %s138, %s154
      %p156 = scmp.eq.s32.totalorder %s20, 0
      %p157 = por %p155, %p156
      %p158 = scmp.le.s32.totalorder 1, %s14
      %p159 = scmp.lt.s32.totalorder %s14, 3
      %p160 = pnand %p158, %p159
      %p161 = pneg %p160
      // Predicated region
      $region9: #{tpu_custom_call.1} parent=5 // pred_check
        _
      $region10: #{tpu_custom_call.1} parent=5 // pred_check_branch
        %163 = sbr.rel (%p160) target = $region12
      $region11: #{tpu_custom_call.1} parent=5 // pred_region
        %s164 = ssub.s32 %s14, 1
        // Predicated region
        $region13: #{tpu_custom_call.1} parent=11 // pred_check
          %p165 = pneg %p61
        $region14: #{tpu_custom_call.1} parent=11 // pred_check_branch
          %167 = sbr.rel (%p165) target = $region16
        $region15: #{tpu_custom_call.1} parent=11 // pred_region
          _
        $region16: #{tpu_custom_call.1} parent=11 // pred_fallthru
          _
        // Predicated region
        $region17: #{tpu_custom_call.1} parent=11 // pred_check
          %p168 = pneg %p82
        $region18: #{tpu_custom_call.1} parent=11 // pred_check_branch
          %170 = sbr.rel (%p168) target = $region20
        $region19: #{tpu_custom_call.1} parent=11 // pred_region
          _
        $region20: #{tpu_custom_call.1} parent=11 // pred_fallthru
          _
        // Predicated region
        $region21: #{tpu_custom_call.1} parent=11 // pred_check
          %p171 = pneg %p103
        $region22: #{tpu_custom_call.1} parent=11 // pred_check_branch
          %173 = sbr.rel (%p171) target = $region24
        $region23: #{tpu_custom_call.1} parent=11 // pred_region
          _
        $region24: #{tpu_custom_call.1} parent=11 // pred_fallthru
          _
        // Predicated region
        $region25: #{tpu_custom_call.1} parent=11 // pred_check
          %p174 = pneg %p124
        $region26: #{tpu_custom_call.1} parent=11 // pred_check_branch
          %176 = sbr.rel (%p174) target = $region28
        $region27: #{tpu_custom_call.1} parent=11 // pred_region
          _
        $region28: #{tpu_custom_call.1} parent=11 // pred_fallthru
          _
      $region12: #{tpu_custom_call.1} parent=5 // pred_fallthru
        _
      %p177 = scmp.lt.s32.totalorder %s14, 2
      // Predicated region
      $region29: #{tpu_custom_call.1} parent=5 // pred_check
        %p178 = pneg %p177
      $region30: #{tpu_custom_call.1} parent=5 // pred_check_branch
        %180 = sbr.rel (%p178) target = $region32
      $region31: #{tpu_custom_call.1} parent=5 // pred_region
        // Predicated region
        $region33: #{tpu_custom_call.1} parent=31 // pred_check
          %p181 = pneg %p34
        $region34: #{tpu_custom_call.1} parent=31 // pred_check_branch
          %183 = sbr.rel (%p181) target = $region36
        $region35: #{tpu_custom_call.1} parent=31 // pred_region
          %p184 = scmp.lt.s32.totalorder %s14, 1
          %s185 = scalar_select %p184, %s14, 1
          %s186 = smul.addr %s185, 4
          %s187 = scalar_lea.vmem %s0, %s186
        $region36: #{tpu_custom_call.1} parent=31 // pred_fallthru
          _
      $region32: #{tpu_custom_call.1} parent=5 // pred_fallthru
        _
      %p188 = scmp.le.s32.totalorder 1, %s14
      %p189 = scmp.lt.s32.totalorder %s14, 3
      %p190 = pnand %p188, %p189
      %p191 = pneg %p190
      // Predicated region
      $region37: #{tpu_custom_call.1} parent=5 // pred_check
        _
      $region38: #{tpu_custom_call.1} parent=5 // pred_check_branch
        %193 = sbr.rel (%p190) target = $region40
      $region39: #{tpu_custom_call.1} parent=5 // pred_region
        %s194 = ssub.s32 %s14, 1
        %p195 = scmp.lt.s32.totalorder %s19, 1
        %s196 = scalar_select %p195, %s19, 1
        %s197 = smul.addr %s196, 4
        %s198 = scalar_lea.vmem %s0, %s197
        %p199 = pneg %p40
        %p200 = pneg %p37
        %p201 = pneg %p61
        %p202 = pneg %p58
        %p203 = pneg %p82
        %p204 = pneg %p79
        %p205 = pneg %p103
        %p206 = pneg %p100
        %p207 = pneg %p124
        %p208 = pneg %p121
        %p209 = pneg %p150
        %p210 = pneg %p147
        %s211 = sand.u32 %s137, 1
        %s212 = scalar_lea.sflag [#allocation3], %s211
        %s213 = sand.u32 %s137, 1
        %s214 = smul.addr %s213, 2
        %s215 = scalar_lea.vmem [#allocation2], %s214
        %p216 = scmp.lt.s32.totalorder %s19, 1
        %s217 = scalar_select %p216, %s19, 1
        %s218 = smul.addr %s217, 4
        %s219 = scalar_lea.vmem %s0, %s218
        %v220 = vld [vmem:[%s1] sm:$0xff]
        %v221 = vld [vmem:[%s1 + $0x8] sm:$0xff]
        %v222 = vld [vmem:[%s1 + $0x10] sm:$0xff]
        %v223 = vld [vmem:[%s1 + $0x18] sm:$0xff]
        %v224 = vld [vmem:[%s1 + $0x20] sm:$0xff]
        %v225 = vld [vmem:[%s1 + $0x28] sm:$0xff]
        %v226 = vld [vmem:[%s1 + $0x30] sm:$0xff]
        %v227 = vld [vmem:[%s1 + $0x38] sm:$0xff]
        %v228 = vld [vmem:[%s1 + $0x40] sm:$0xff]
        %v229 = vld [vmem:[%s1 + $0x48] sm:$0xff]
        %v230 = vld [vmem:[%s1 + $0x50] sm:$0xff]
        %v231 = vld [vmem:[%s1 + $0x58] sm:$0xff]
        %v232 = vld [vmem:[%s1 + $0x60] sm:$0xff]
        %v233 = vld [vmem:[%s1 + $0x68] sm:$0xff]
        %v234 = vld [vmem:[%s1 + $0x70] sm:$0xff]
        %v235 = vld [vmem:[%s1 + $0x78] sm:$0xff]
        %v236 = vld [vmem:[%s219] sm:$0xf]
        %v237 = vld [vmem:[%s2] sm:$0xff]
        %v238 = vld [vmem:[%s2 + $0x8] sm:$0xff]
        %v239 = vld [vmem:[%s2 + $0x10] sm:$0xff]
        %v240 = vld [vmem:[%s2 + $0x18] sm:$0xff]
        %v241 = vld [vmem:[%s2 + $0x20] sm:$0xff]
        %v242 = vld [vmem:[%s2 + $0x28] sm:$0xff]
        %v243 = vld [vmem:[%s2 + $0x30] sm:$0xff]
        %v244 = vld [vmem:[%s2 + $0x38] sm:$0xff]
        %v245 = vld [vmem:[%s2 + $0x40] sm:$0xff]
        %v246 = vld [vmem:[%s2 + $0x48] sm:$0xff]
        %v247 = vld [vmem:[%s2 + $0x50] sm:$0xff]
        %v248 = vld [vmem:[%s2 + $0x58] sm:$0xff]
        %v249 = vld [vmem:[%s2 + $0x60] sm:$0xff]
        %v250 = vld [vmem:[%s2 + $0x68] sm:$0xff]
        %v251 = vld [vmem:[%s2 + $0x70] sm:$0xff]
        %v252 = vld [vmem:[%s2 + $0x78] sm:$0xff]
        %254 = vset.pattern.permute.xlu0 0
        %255 = vperm.xlu0 %254, %v237
        %v256 = vpop.permute.xlu0 %255
        %259 = vset.pattern.permute.xlu0 0
        %260 = vperm.xlu0 %259, %v238
        %v261 = vpop.permute.xlu0 %260
        %264 = vset.pattern.permute.xlu0 0
        %265 = vperm.xlu0 %264, %v239
        %v266 = vpop.permute.xlu0 %265
        %269 = vset.pattern.permute.xlu0 0
        %270 = vperm.xlu0 %269, %v240
        %v271 = vpop.permute.xlu0 %270
        %274 = vset.pattern.permute.xlu0 0
        %275 = vperm.xlu0 %274, %v241
        %v276 = vpop.permute.xlu0 %275
        %279 = vset.pattern.permute.xlu0 0
        %280 = vperm.xlu0 %279, %v242
        %v281 = vpop.permute.xlu0 %280
        %284 = vset.pattern.permute.xlu0 0
        %285 = vperm.xlu0 %284, %v243
        %v286 = vpop.permute.xlu0 %285
        %289 = vset.pattern.permute.xlu0 0
        %290 = vperm.xlu0 %289, %v244
        %v291 = vpop.permute.xlu0 %290
        %294 = vset.pattern.permute.xlu0 0
        %295 = vperm.xlu0 %294, %v245
        %v296 = vpop.permute.xlu0 %295
        %299 = vset.pattern.permute.xlu0 0
        %300 = vperm.xlu0 %299, %v246
        %v301 = vpop.permute.xlu0 %300
        %304 = vset.pattern.permute.xlu0 0
        %305 = vperm.xlu0 %304, %v247
        %v306 = vpop.permute.xlu0 %305
        %309 = vset.pattern.permute.xlu0 0
        %310 = vperm.xlu0 %309, %v248
        %v311 = vpop.permute.xlu0 %310
        %314 = vset.pattern.permute.xlu0 0
        %315 = vperm.xlu0 %314, %v249
        %v316 = vpop.permute.xlu0 %315
        %319 = vset.pattern.permute.xlu0 0
        %320 = vperm.xlu0 %319, %v250
        %v321 = vpop.permute.xlu0 %320
        %324 = vset.pattern.permute.xlu0 0
        %325 = vperm.xlu0 %324, %v251
        %v326 = vpop.permute.xlu0 %325
        %329 = vset.pattern.permute.xlu0 0
        %330 = vperm.xlu0 %329, %v252
        %v331 = vpop.permute.xlu0 %330
        %vm333 = vcmask 31744
        %v335 = vsel %vm333, %v220, 0
        %v338 = vsel %vm333, %v221, 0
        %v341 = vsel %vm333, %v222, 0
        %v344 = vsel %vm333, %v223, 0
        %v347 = vsel %vm333, %v224, 0
        %v350 = vsel %vm333, %v225, 0
        %v353 = vsel %vm333, %v226, 0
        %v356 = vsel %vm333, %v227, 0
        %v359 = vsel %vm333, %v228, 0
        %v362 = vsel %vm333, %v229, 0
        %v365 = vsel %vm333, %v230, 0
        %v368 = vsel %vm333, %v231, 0
        %v371 = vsel %vm333, %v232, 0
        %v374 = vsel %vm333, %v233, 0
        %v377 = vsel %vm333, %v234, 0
        %v380 = vsel %vm333, %v235, 0
        %vm382 = vcmask 1043456
        %v384 = vsel %vm382, %v236, 0
        %386 = vmatprep.subr.mxu0 0.0
        %387 = vmatpush1.msra.mxu0 0.0
        %388 = vmatprep.subr.mxu0 0.0
        %389 = vmatpush1.msra.mxu0 0.0
        %390 = vmatprep.subr.mxu0 0.0
        %391 = vmatpush1.msra.mxu0 0.0
        %392 = vmatprep.subr.mxu0 0.0
        %393 = vmatpush1.msra.mxu0 0.0
        %394 = vmatprep.subr.mxu0 0.0
        %395 = vmatpush1.msra.mxu0 0.0
        %396 = vmatprep.subr.mxu0 0.0
        %397 = vmatpush1.msra.mxu0 0.0
        %398 = vmatprep.subr.mxu0 0.0
        %399 = vmatpush1.msra.mxu0 0.0
        %400 = vmatprep.subr.mxu0 0.0
        %401 = vmatpush1.msra.mxu0 0.0
        %402 = vmatprep.subr.mxu0 0.0
        %403 = vmatpush1.msra.mxu0 0.0
        %404 = vmatprep.subr.mxu0 0.0
        %405 = vmatpush1.msra.mxu0 0.0
        %406 = vmatprep.subr.mxu0 0.0
        %407 = vmatpush1.msra.mxu0 0.0
        %408 = vmatprep.subr.mxu0 0.0
        %409 = vmatpush1.msra.mxu0 0.0
        %410 = vmatprep.subr.mxu0 0.0
        %411 = vmatpush1.msra.mxu0 0.0
        %412 = vmatprep.subr.mxu0 0.0
        %413 = vmatpush1.msra.mxu0 0.0
        %414 = vmatprep.subr.mxu0 0.0
        %415 = vmatpush1.msra.mxu0 0.0
        %416 = vmatprep.subr.mxu0 0.0
        %417 = vmatpush1.msra.mxu0 %v384
        %418 = vmatprep.subr.mxu0 0.0
        %419 = vmatpush2.msra.mxu0 0.0
        %420 = vmatprep.subr.mxu0 0.0
        %421 = vmatpush2.msra.mxu0 0.0
        %422 = vmatprep.subr.mxu0 0.0
        %423 = vmatpush2.msra.mxu0 0.0
        %424 = vmatprep.subr.mxu0 0.0
        %425 = vmatpush2.msra.mxu0 0.0
        %426 = vmatprep.subr.mxu0 0.0
        %427 = vmatpush2.msra.mxu0 0.0
        %428 = vmatprep.subr.mxu0 0.0
        %429 = vmatpush2.msra.mxu0 0.0
        %430 = vmatprep.subr.mxu0 0.0
        %431 = vmatpush2.msra.mxu0 0.0
        %432 = vmatprep.subr.mxu0 0.0
        %433 = vmatpush2.msra.mxu0 0.0
        %434 = vmatprep.subr.mxu0 0.0
        %435 = vmatpush2.msra.mxu0 0.0
        %436 = vmatprep.subr.mxu0 0.0
        %437 = vmatpush2.msra.mxu0 0.0
        %438 = vmatprep.subr.mxu0 0.0
        %439 = vmatpush2.msra.mxu0 0.0
        %440 = vmatprep.subr.mxu0 0.0
        %441 = vmatpush2.msra.mxu0 0.0
        %442 = vmatprep.subr.mxu0 0.0
        %443 = vmatpush2.msra.mxu0 0.0
        %444 = vmatprep.subr.mxu0 0.0
        %445 = vmatpush2.msra.mxu0 0.0
        %446 = vmatprep.subr.mxu0 0.0
        %447 = vmatpush2.msra.mxu0 0.0
        %448 = vmatprep.subr.mxu0 0.0
        %449 = vmatpush2.msra.mxu0 0.0
        %450 = vmatprep.mubr.f32.mxu0 0.0
        %451 = vmatmul.mubr.f32.gmra.mxu0 %v335
        %v452 = vpop.f32.mrf.mxu0
        %v453 = vadd.f32 %v256, %v452
        %v454 = vpop.f32.mrf.mxu0
        %455 = vmatprep.mubr.f32.mxu0 0.0
        %456 = vmatmul.mubr.f32.gmra.mxu0 %v338
        %v457 = vpop.f32.mrf.mxu0
        %v458 = vadd.f32 %v261, %v457
        %v459 = vpop.f32.mrf.mxu0
        %460 = vmatprep.mubr.f32.mxu0 0.0
        %461 = vmatmul.mubr.f32.gmra.mxu0 %v341
        %v462 = vpop.f32.mrf.mxu0
        %v463 = vadd.f32 %v266, %v462
        %v464 = vpop.f32.mrf.mxu0
        %465 = vmatprep.mubr.f32.mxu0 0.0
        %466 = vmatmul.mubr.f32.gmra.mxu0 %v344
        %v467 = vpop.f32.mrf.mxu0
        %v468 = vadd.f32 %v271, %v467
        %v469 = vpop.f32.mrf.mxu0
        %470 = vmatprep.mubr.f32.mxu0 0.0
        %471 = vmatmul.mubr.f32.gmra.mxu0 %v347
        %v472 = vpop.f32.mrf.mxu0
        %v473 = vadd.f32 %v276, %v472
        %v474 = vpop.f32.mrf.mxu0
        %475 = vmatprep.mubr.f32.mxu0 0.0
        %476 = vmatmul.mubr.f32.gmra.mxu0 %v350
        %v477 = vpop.f32.mrf.mxu0
        %v478 = vadd.f32 %v281, %v477
        %v479 = vpop.f32.mrf.mxu0
        %480 = vmatprep.mubr.f32.mxu0 0.0
        %481 = vmatmul.mubr.f32.gmra.mxu0 %v353
        %v482 = vpop.f32.mrf.mxu0
        %v483 = vadd.f32 %v286, %v482
        %v484 = vpop.f32.mrf.mxu0
        %485 = vmatprep.mubr.f32.mxu0 0.0
        %486 = vmatmul.mubr.f32.gmra.mxu0 %v356
        %v487 = vpop.f32.mrf.mxu0
        %v488 = vadd.f32 %v291, %v487
        %v489 = vpop.f32.mrf.mxu0
        %490 = vmatprep.mubr.f32.mxu0 0.0
        %491 = vmatmul.mubr.f32.gmra.mxu0 %v359
        %v492 = vpop.f32.mrf.mxu0
        %v493 = vadd.f32 %v296, %v492
        %v494 = vpop.f32.mrf.mxu0
        %495 = vmatprep.mubr.f32.mxu0 0.0
        %496 = vmatmul.mubr.f32.gmra.mxu0 %v362
        %v497 = vpop.f32.mrf.mxu0
        %v498 = vadd.f32 %v301, %v497
        %v499 = vpop.f32.mrf.mxu0
        %500 = vmatprep.mubr.f32.mxu0 0.0
        %501 = vmatmul.mubr.f32.gmra.mxu0 %v365
        %v502 = vpop.f32.mrf.mxu0
        %v503 = vadd.f32 %v306, %v502
        %v504 = vpop.f32.mrf.mxu0
        %505 = vmatprep.mubr.f32.mxu0 0.0
        %506 = vmatmul.mubr.f32.gmra.mxu0 %v368
        %v507 = vpop.f32.mrf.mxu0
        %v508 = vadd.f32 %v311, %v507
        %v509 = vpop.f32.mrf.mxu0
        %510 = vmatprep.mubr.f32.mxu0 0.0
        %511 = vmatmul.mubr.f32.gmra.mxu0 %v371
        %v512 = vpop.f32.mrf.mxu0
        %v513 = vadd.f32 %v316, %v512
        %v514 = vpop.f32.mrf.mxu0
        %515 = vmatprep.mubr.f32.mxu0 0.0
        %516 = vmatmul.mubr.f32.gmra.mxu0 %v374
        %v517 = vpop.f32.mrf.mxu0
        %v518 = vadd.f32 %v321, %v517
        %v519 = vpop.f32.mrf.mxu0
        %520 = vmatprep.mubr.f32.mxu0 0.0
        %521 = vmatmul.mubr.f32.gmra.mxu0 %v377
        %v522 = vpop.f32.mrf.mxu0
        %v523 = vadd.f32 %v326, %v522
        %v524 = vpop.f32.mrf.mxu0
        %525 = vmatprep.mubr.f32.mxu0 0.0
        %526 = vmatmul.mubr.f32.gmra.mxu0 %v380
        %v527 = vpop.f32.mrf.mxu0
        %v528 = vadd.f32 %v331, %v527
        %v529 = vpop.f32.mrf.mxu0
        %530 = vdwg.mxu0
        %v531 = vmax.f32 %v453, 0.0
        %v532 = vmax.f32 %v458, 0.0
        %v533 = vmax.f32 %v463, 0.0
        %v534 = vmax.f32 %v468, 0.0
        %v535 = vmax.f32 %v473, 0.0
        %v536 = vmax.f32 %v478, 0.0
        %v537 = vmax.f32 %v483, 0.0
        %v538 = vmax.f32 %v488, 0.0
        %v539 = vmax.f32 %v493, 0.0
        %v540 = vmax.f32 %v498, 0.0
        %v541 = vmax.f32 %v503, 0.0
        %v542 = vmax.f32 %v508, 0.0
        %v543 = vmax.f32 %v513, 0.0
        %v544 = vmax.f32 %v518, 0.0
        %v545 = vmax.f32 %v523, 0.0
        %v546 = vmax.f32 %v528, 0.0
        %v547 = vld [vmem:[%s3] sm:$0x3]
        %v548 = vld [vmem:[%s4] sm:$0x3]
        %550 = vset.pattern.permute.xlu0 0
        %551 = vperm.xlu0 %550, %v548
        %v552 = vpop.permute.xlu0 %551
        %554 = vmatprep.subr.mxu0 0.0
        %555 = vmatpush1.msra.mxu0 %v546
        %556 = vmatprep.subr.mxu0 0.0
        %557 = vmatpush1.msra.mxu0 %v545
        %558 = vmatprep.subr.mxu0 0.0
        %559 = vmatpush1.msra.mxu0 %v544
        %560 = vmatprep.subr.mxu0 0.0
        %561 = vmatpush1.msra.mxu0 %v543
        %562 = vmatprep.subr.mxu0 0.0
        %563 = vmatpush1.msra.mxu0 %v542
        %564 = vmatprep.subr.mxu0 0.0
        %565 = vmatpush1.msra.mxu0 %v541
        %566 = vmatprep.subr.mxu0 0.0
        %567 = vmatpush1.msra.mxu0 %v540
        %568 = vmatprep.subr.mxu0 0.0
        %569 = vmatpush1.msra.mxu0 %v539
        %570 = vmatprep.subr.mxu0 0.0
        %571 = vmatpush1.msra.mxu0 %v538
        %572 = vmatprep.subr.mxu0 0.0
        %573 = vmatpush1.msra.mxu0 %v537
        %574 = vmatprep.subr.mxu0 0.0
        %575 = vmatpush1.msra.mxu0 %v536
        %576 = vmatprep.subr.mxu0 0.0
        %577 = vmatpush1.msra.mxu0 %v535
        %578 = vmatprep.subr.mxu0 0.0
        %579 = vmatpush1.msra.mxu0 %v534
        %580 = vmatprep.subr.mxu0 0.0
        %581 = vmatpush1.msra.mxu0 %v533
        %582 = vmatprep.subr.mxu0 0.0
        %583 = vmatpush1.msra.mxu0 %v532
        %584 = vmatprep.subr.mxu0 0.0
        %585 = vmatpush1.msra.mxu0 %v531
        %586 = vmatprep.subr.mxu0 0.0
        %587 = vmatpush2.msra.mxu0 0.0
        %588 = vmatprep.subr.mxu0 0.0
        %589 = vmatpush2.msra.mxu0 0.0
        %590 = vmatprep.subr.mxu0 0.0
        %591 = vmatpush2.msra.mxu0 0.0
        %592 = vmatprep.subr.mxu0 0.0
        %593 = vmatpush2.msra.mxu0 0.0
        %594 = vmatprep.subr.mxu0 0.0
        %595 = vmatpush2.msra.mxu0 0.0
        %596 = vmatprep.subr.mxu0 0.0
        %597 = vmatpush2.msra.mxu0 0.0
        %598 = vmatprep.subr.mxu0 0.0
        %599 = vmatpush2.msra.mxu0 0.0
        %600 = vmatprep.subr.mxu0 0.0
        %601 = vmatpush2.msra.mxu0 0.0
        %602 = vmatprep.subr.mxu0 0.0
        %603 = vmatpush2.msra.mxu0 0.0
        %604 = vmatprep.subr.mxu0 0.0
        %605 = vmatpush2.msra.mxu0 0.0
        %606 = vmatprep.subr.mxu0 0.0
        %607 = vmatpush2.msra.mxu0 0.0
        %608 = vmatprep.subr.mxu0 0.0
        %609 = vmatpush2.msra.mxu0 0.0
        %610 = vmatprep.subr.mxu0 0.0
        %611 = vmatpush2.msra.mxu0 0.0
        %612 = vmatprep.subr.mxu0 0.0
        %613 = vmatpush2.msra.mxu0 0.0
        %614 = vmatprep.subr.mxu0 0.0
        %615 = vmatpush2.msra.mxu0 0.0
        %616 = vmatprep.subr.mxu0 0.0
        %617 = vmatpush2.msra.mxu0 0.0
        %618 = vmatprep.mubr.f32.mxu0 0.0
        %619 = vmatmul.mubr.f32.gmra.mxu0 %v547
        %v620 = vpop.f32.mrf.mxu0
        %v621 = vadd.f32 %v552, %v620
        %v622 = vpop.f32.mrf.mxu0
        %623 = vdwg.mxu0
        %vm624 = vcmask 1041408
        %v625 = vsel %vm624, %v621, -inf
        %v626 = vrot.slane %v625, 4
        %v627 = vmax.f32 %v625, %v626
        %v628 = vrot.slane %v627, 2
        %v629 = vmax.f32 %v627, %v628
        %v630 = vrot.slane %v629, 1
        %v631 = vmax.f32 %v629, %v630
        %v632 = vsub.f32 %v621, %v631
        %v633 = vmul.f32 %v632, 1.442695
        %v634 = vpow.pop %v633
        %v635 = vsel %vm624, %v634, 0.0
        %v636 = vrot.slane %v635, 4
        %v637 = vadd.f32 %v635, %v636
        %v638 = vrot.slane %v637, 2
        %v639 = vadd.f32 %v637, %v638
        %v640 = vrot.slane %v639, 1
        %v641 = vadd.f32 %v639, %v640
        %v642 = vrcp.pop %v641
        %v643 = vmul.f32 %v634, %v642
        %644 = vst [vmem:[%s215] sm:$0x3] %v643
        %s645 = sand.u32 %s137, 1
        %s646 = scalar_lea.sflag [#allocation3], %s645
        %s647 = sand.u32 %s137, 1
        %s648 = smul.addr %s647, 2
        %s649 = scalar_lea.vmem [#allocation2], %s648
        // Predicated region
        $region41: #{tpu_custom_call.1} parent=39 // pred_check
          %p650 = pneg %p147
        $region42: #{tpu_custom_call.1} parent=39 // pred_check_branch
          %652 = sbr.rel (%p650) target = $region44
        $region43: #{tpu_custom_call.1} parent=39 // pred_region
          %s654 = ssub.s32 32, 32
          %655 = vsyncadd %s646, %s654
          %s656 = smul.addr %s19, 32
          %s657 = scalar_lea.hbm %s5, %s656
          %s659 = sshll.u32 %s649, 4
          %s660 = int_to_ptr.vmem [resolvable:$true] %s659
          %662 = dma.vmem_to_hbm [thread:$0]  %s660, 32, %s657, %s646
        $region44: #{tpu_custom_call.1} parent=39 // pred_fallthru
          _
      $region40: #{tpu_custom_call.1} parent=5 // pred_fallthru
        _
      %p663 = scmp.le.s32.totalorder 2, %s14
      // Predicated region
      $region45: #{tpu_custom_call.1} parent=5 // pred_check
        %p664 = pneg %p663
      $region46: #{tpu_custom_call.1} parent=5 // pred_check_branch
        %666 = sbr.rel (%p664) target = $region48
      $region47: #{tpu_custom_call.1} parent=5 // pred_region
        %s667 = ssub.s32 %s14, 2
        // Predicated region
        $region49: #{tpu_custom_call.1} parent=47 // pred_check
          %p668 = pneg %p153
        $region50: #{tpu_custom_call.1} parent=47 // pred_check_branch
          %670 = sbr.rel (%p668) target = $region52
        $region51: #{tpu_custom_call.1} parent=47 // pred_region
          %s671 = sand.u32 %s138, 1
          %s672 = scalar_lea.sflag [#allocation3], %s671
          %s673 = sand.u32 %s138, 1
          %s674 = smul.addr %s673, 2
          %s675 = scalar_lea.vmem [#allocation2], %s674
          %676 = dma.done %s672, 32
        $region52: #{tpu_custom_call.1} parent=47 // pred_fallthru
          _
      $region48: #{tpu_custom_call.1} parent=5 // pred_fallthru
        _
    $region6: #{tpu_custom_call.1} parent=1 // loop_footer
      %s18 = sadd.s32 1, %s14
    $region7: #{tpu_custom_call.1} parent=1 // loop_footer_branch
      %13 = sbr.rel target = $region3
    $region8: #{tpu_custom_call.1} parent=1 // loop_exit
      _
    %677 = vsyncpa [#allocation3], 1
    %s678 = scalar_lea.sflag [#allocation3], 1
    %679 = vsyncpa %s678, 1

</llo_original>
